<compile_context>
chip_gen: v7x
topology: tpu7x:2x2x1
jax: 0.10.0
libtpu: 0.0.40
codegen_flags: <defaults>
</compile_context>

<pallas_src>
import jax
import jax.numpy as jnp
from jax.experimental import pallas as pl
from jax.experimental.pallas import tpu as pltpu


def _round_up(x, m):
    return ((x + m - 1) // m) * m


def ffn_kernel(x_ref, w1_ref, b1_ref, w2_ref, b2_ref, g_ref, beta_ref,
               o_ref, acc_ref):
    # grid = (M tiles [parallel], 4H chunks [arbitrary, reduction, last]).
    k = pl.program_id(1)
    x = x_ref[...]                       # (tile_m, H), input dtype (f32)

    @pl.when(k == 0)
    def _init():
        # Fold second bias + residual into the accumulator initialization.
        acc_ref[...] = b2_ref[...] + x.astype(jnp.float32)

    w1 = w1_ref[...]                     # (H, tn), bf16 (or f32)
    w2 = w2_ref[...]                     # (tn, H), bf16 (or f32)

    # w_1 (Conv1d k=1) -> ReLU; MXU with f32 accumulation.
    h = jnp.dot(x.astype(w1.dtype), w1, preferred_element_type=jnp.float32)
    h = jnp.maximum(h + b1_ref[...], 0.0)

    # partial w_2 (Conv1d k=1) contribution of this 4H chunk.
    acc_ref[...] += jnp.dot(h.astype(w2.dtype), w2,
                            preferred_element_type=jnp.float32)

    @pl.when(k == pl.num_programs(1) - 1)
    def _finalize():
        # LayerNorm (PyTorch defaults: biased variance, eps=1e-5).
        y = acc_ref[...]
        mean = jnp.mean(y, axis=-1, keepdims=True)
        var = jnp.mean(jnp.square(y - mean), axis=-1, keepdims=True)
        scale = jax.lax.rsqrt(var + 1e-5) * g_ref[...]      # fold gamma
        o_ref[...] = ((y - mean) * scale + beta_ref[...]).astype(o_ref.dtype)


def ffn_forward(x, w1, b1, w2, b2, gamma, beta, *, tile_m=256, tile_n=512,
                matmul_dtype=jnp.bfloat16):
    """x: (B, T, H). w1: (H, 4H), w2: (4H, H). Returns (B, T, H)."""
    B, T, H = x.shape
    H4 = w1.shape[1]
    M = B * T
    x2 = x.reshape(M, H)

    # --- VMEM budget (generation aware: ~96 MiB on v5e/v6e, ~48 MiB on v7x) --
    try:
        vmem_cap = int(pltpu.get_tpu_info().vmem_capacity_bytes)
    except Exception:
        vmem_cap = 128 * 1024 * 1024
    vmem_limit = min(vmem_cap * 3 // 4, 100 * 1024 * 1024)

    wbytes = jnp.dtype(matmul_dtype).itemsize
    xbytes = jnp.dtype(x.dtype).itemsize

    # --- tile selection ------------------------------------------------------
    # Rows per step: large (default 256) but clamped to the problem size;
    # second-to-last block dim must stay a multiple of 8.
    tile_m = max(8, min(_round_up(tile_m, 8), _round_up(M, 8)))

    # 4H chunk candidates: multiples of 128 that divide 4H exactly (padded
    # chunks would add garbage to the accumulator); otherwise no chunking.
    if H4 % 128 == 0:
        tn_candidates = sorted(
            (d for d in range(128, H4 + 1, 128)
             if H4 % d == 0 and d <= max(tile_n, 128)),
            reverse=True)
    else:
        tn_candidates = [H4]

    def vmem_estimate(tm, tn):
        est = 2 * tm * H * xbytes                 # x tile (double-buffered)
        est += 2 * (H * tn + tn * H) * wbytes     # W1 / W2 chunks
        est += 2 * _round_up(tn, 128) * 4         # b1 chunk
        est += 2 * tm * H * xbytes                # out tile
        est += tm * H * 4                         # f32 accumulator scratch
        est += 6 * _round_up(H, 128) * 4          # b2 / gamma / beta
        return est

    ci = 0
    tn = tn_candidates[ci]
    while vmem_estimate(tile_m, tn) > vmem_limit:
        if ci + 1 < len(tn_candidates):
            ci += 1
            tn = tn_candidates[ci]
        elif tile_m > 64:
            tile_m = _round_up(max(64, tile_m // 2), 8)
        else:
            break

    # --- operand prep --------------------------------------------------------
    # Weights go to the MXU dtype (bf16 by default); biases / LN params stay f32.
    w1c = w1.astype(matmul_dtype)
    w2c = w2.astype(matmul_dtype)
    b1_2 = b1.reshape(1, H4).astype(jnp.float32)
    b2_2 = b2.reshape(1, H).astype(jnp.float32)
    g_2 = gamma.reshape(1, H).astype(jnp.float32)
    be_2 = beta.reshape(1, H).astype(jnp.float32)

    grid = (pl.cdiv(M, tile_m), H4 // tn)

    cost = pl.CostEstimate(
        flops=2 * 2 * M * H * H4 + 8 * M * H,          # two GEMMs + epilogue
        transcendentals=M,                              # one rsqrt per row
        bytes_accessed=(2 * M * H * xbytes              # x in + out
                        + (H * H4 + H4 * H) * wbytes    # weights
                        + (H4 + 3 * H) * 4))            # biases + LN params

    out = pl.pallas_call(
        ffn_kernel,
        out_shape=jax.ShapeDtypeStruct((M, H), x.dtype),
        grid_spec=pltpu.PrefetchScalarGridSpec(
            num_scalar_prefetch=0,
            grid=grid,
            in_specs=[
                pl.BlockSpec((tile_m, H), lambda i, k: (i, 0)),   # x tile
                pl.BlockSpec((H, tn), lambda i, k: (0, k)),       # W1 chunk
                pl.BlockSpec((1, tn), lambda i, k: (0, k)),       # b1 chunk
                pl.BlockSpec((tn, H), lambda i, k: (k, 0)),       # W2 chunk
                pl.BlockSpec((1, H), lambda i, k: (0, 0)),        # b2
                pl.BlockSpec((1, H), lambda i, k: (0, 0)),        # gamma
                pl.BlockSpec((1, H), lambda i, k: (0, 0)),        # beta
            ],
            out_specs=pl.BlockSpec((tile_m, H), lambda i, k: (i, 0)),
            scratch_shapes=[pltpu.VMEM((tile_m, H), jnp.float32)],
        ),
        compiler_params=pltpu.CompilerParams(
            dimension_semantics=("parallel", "arbitrary"),
            vmem_limit_bytes=vmem_limit,
        ),
        cost_estimate=cost,
    )(x2, w1c, b1_2, w2c, b2_2, g_2, be_2)
    return out.reshape(B, T, H)


def xavier_uniform(key, shape, gain):
    # shape = (fan_out, fan_in) matching Conv1d weight (out, in, 1) squeezed
    fan_out, fan_in = shape
    limit = gain * (6.0 / (fan_in + fan_out)) ** 0.5
    return jax.random.uniform(key, shape, jnp.float32, -limit, limit)


def reference(x, w1, b1, w2, b2, gamma, beta):
    # pure-f32 reference matching the PyTorch module semantics
    B, T, H = x.shape
    x2 = x.reshape(B * T, H)
    h = jnp.maximum(x2 @ w1 + b1, 0.0)
    y = h @ w2 + b2 + x2
    mean = jnp.mean(y, axis=-1, keepdims=True)
    var = jnp.mean((y - mean) ** 2, axis=-1, keepdims=True)
    out = (y - mean) * jax.lax.rsqrt(var + 1e-5) * gamma + beta
    return out.reshape(B, T, H)


if __name__ == "__main__":
    B, T, H = 2, 8, 32           # small shapes consistent with FFN(num_hidden=32)
    H4 = 4 * H
    key = jax.random.PRNGKey(0)
    k_x, k_w1, k_b1, k_w2, k_b2, k_g, k_be = jax.random.split(key, 7)

    x = jax.random.normal(k_x, (B, T, H), jnp.float32)

    relu_gain = 2.0 ** 0.5       # nn.init.calculate_gain('relu')
    lin_gain = 1.0               # nn.init.calculate_gain('linear')

    # Conv1d weights (out, in, 1) stored transposed as (in, out) for x @ W
    w1 = xavier_uniform(k_w1, (H4, H), relu_gain).T        # (H, 4H)
    b1 = jax.random.uniform(k_b1, (H4,), jnp.float32,
                            -1.0 / H ** 0.5, 1.0 / H ** 0.5)
    w2 = xavier_uniform(k_w2, (H, H4), lin_gain).T         # (4H, H)
    b2 = jax.random.uniform(k_b2, (H,), jnp.float32,
                            -1.0 / H4 ** 0.5, 1.0 / H4 ** 0.5)

    # LayerNorm affine params (module inits to ones/zeros; perturbed slightly
    # so the affine path is actually exercised by the check).
    gamma = 1.0 + 0.1 * jax.random.normal(k_g, (H,), jnp.float32)
    beta = 0.1 * jax.random.normal(k_be, (H,), jnp.float32)

    ref = reference(x, w1, b1, w2, b2, gamma, beta)

    # exact-precision path (f32 MXU operands) -> tight check vs f32 reference
    out_f32 = ffn_forward(x, w1, b1, w2, b2, gamma, beta,
                          matmul_dtype=jnp.float32)
    out_f32 = jax.block_until_ready(out_f32)
    assert out_f32.shape == (B, T, H)
    assert jnp.allclose(out_f32, ref, atol=1e-4, rtol=1e-4), "f32 mismatch"

    # fast path (bf16 MXU operands, f32 accumulation) -> bf16-level tolerance
    out_bf16 = ffn_forward(x, w1, b1, w2, b2, gamma, beta)
    out_bf16 = jax.block_until_ready(out_bf16)
    assert jnp.allclose(out_bf16, ref, atol=5e-2, rtol=5e-2), "bf16 mismatch"

    # TODO(synk): self.dropout is defined in FFN.__init__ but never applied in
    # FFN.forward in the PyTorch source, so it is intentionally omitted here.
    print("KERNEL_OK")
</pallas_src>

<mosaic_0001>
module attributes {stable_mosaic.version = 11 : i64} {
  func.func @ffn_kernel(%arg0: i32, %arg1: i32, %arg2: memref<16x32xf32, #tpu.memory_space<vmem>>, %arg3: memref<32x128xf32, #tpu.memory_space<vmem>>, %arg4: memref<1x128xf32, #tpu.memory_space<vmem>>, %arg5: memref<128x32xf32, #tpu.memory_space<vmem>>, %arg6: memref<1x32xf32, #tpu.memory_space<vmem>>, %arg7: memref<1x32xf32, #tpu.memory_space<vmem>>, %arg8: memref<1x32xf32, #tpu.memory_space<vmem>>, %arg9: memref<16x32xf32, #tpu.memory_space<vmem>>, %arg10: memref<16x32xf32, #tpu.memory_space<vmem>>) attributes {dimension_semantics = [#tpu.dimension_semantics<parallel>, #tpu.dimension_semantics<arbitrary>], iteration_bounds = array<i64: 1, 1>, scalar_prefetch = 0 : i64, scratch_operands = 1 : i64, tpu.core_type = #tpu.core_type<tc>, window_params = [{transform_indices = @transform_0, window_bounds = array<i64: 16, 32>}, {transform_indices = @transform_1, window_bounds = array<i64: 32, 128>}, {transform_indices = @transform_2, window_bounds = array<i64: 1, 128>}, {transform_indices = @transform_3, window_bounds = array<i64: 128, 32>}, {pipeline_mode = #tpu.pipeline_mode<synchronous>, transform_indices = @transform_4, window_bounds = array<i64: 1, 32>}, {pipeline_mode = #tpu.pipeline_mode<synchronous>, transform_indices = @transform_5, window_bounds = array<i64: 1, 32>}, {pipeline_mode = #tpu.pipeline_mode<synchronous>, transform_indices = @transform_6, window_bounds = array<i64: 1, 32>}, {transform_indices = @transform_7, window_bounds = array<i64: 16, 32>}]} {
    %c0 = arith.constant 0 : index
    %c0_0 = arith.constant 0 : index
    %0 = vector.load %arg2[%c0, %c0_0] : memref<16x32xf32, #tpu.memory_space<vmem>>, vector<16x32xf32>
    %c0_i32 = arith.constant 0 : i32
    %1 = arith.cmpi eq, %arg1, %c0_i32 : i32
    %2 = arith.extui %1 : i1 to i32
    %c0_i32_1 = arith.constant 0 : i32
    %3 = arith.cmpi ne, %2, %c0_i32_1 : i32
    scf.if %3 {
      %c0_16 = arith.constant 0 : index
      %c0_17 = arith.constant 0 : index
      %19 = vector.load %arg6[%c0_16, %c0_17] : memref<1x32xf32, #tpu.memory_space<vmem>>, vector<1x32xf32>
      %20 = vector.broadcast %19 : vector<1x32xf32> to vector<16x32xf32>
      %21 = arith.addf %20, %0 : vector<16x32xf32>
      %c0_18 = arith.constant 0 : index
      %c0_19 = arith.constant 0 : index
      %22 = vector.load %arg10[%c0_18, %c0_19] : memref<16x32xf32, #tpu.memory_space<vmem>>, vector<16x32xf32>
      tpu.vector_store %arg10[%c0_18, %c0_19], %21 {strides = array<i32>} : memref<16x32xf32, #tpu.memory_space<vmem>>, vector<16x32xf32>,
    } else {
    }
    %c0_2 = arith.constant 0 : index
    %c0_3 = arith.constant 0 : index
    %4 = vector.load %arg3[%c0_2, %c0_3] : memref<32x128xf32, #tpu.memory_space<vmem>>, vector<32x128xf32>
    %c0_4 = arith.constant 0 : index
    %c0_5 = arith.constant 0 : index
    %5 = vector.load %arg5[%c0_4, %c0_5] : memref<128x32xf32, #tpu.memory_space<vmem>>, vector<128x32xf32>
    %cst = arith.constant dense<0.000000e+00> : vector<16x128xf32>
    %6 = tpu.matmul %0, %4, %cst {dimension_numbers = #tpu.dot_dimension_numbers<[1], [0], [0], [1], [0, 0, 1, 1], [], []>} : vector<16x32xf32>, vector<32x128xf32>, vector<16x128xf32> -> vector<16x128xf32>
    %c0_6 = arith.constant 0 : index
    %c0_7 = arith.constant 0 : index
    %7 = vector.load %arg4[%c0_6, %c0_7] : memref<1x128xf32, #tpu.memory_space<vmem>>, vector<1x128xf32>
    %8 = vector.broadcast %7 : vector<1x128xf32> to vector<16x128xf32>
    %9 = arith.addf %6, %8 : vector<16x128xf32>
    %cst_8 = arith.constant 0.000000e+00 : f32
    %10 = vector.broadcast %cst_8 : f32 to vector<16x128xf32>
    %11 = arith.maximumf %9, %10 : vector<16x128xf32>
    %c0_9 = arith.constant 0 : index
    %c0_10 = arith.constant 0 : index
    %12 = vector.load %arg10[%c0_9, %c0_10] : memref<16x32xf32, #tpu.memory_space<vmem>>, vector<16x32xf32>
    %cst_11 = arith.constant dense<0.000000e+00> : vector<16x32xf32>
    %13 = tpu.matmul %11, %5, %cst_11 {dimension_numbers = #tpu.dot_dimension_numbers<[1], [0], [0], [1], [0, 0, 1, 1], [], []>} : vector<16x128xf32>, vector<128x32xf32>, vector<16x32xf32> -> vector<16x32xf32>
    %14 = arith.addf %12, %13 : vector<16x32xf32>
    %c0_12 = arith.constant 0 : index
    %c0_13 = arith.constant 0 : index
    %15 = vector.load %arg10[%c0_12, %c0_13] : memref<16x32xf32, #tpu.memory_space<vmem>>, vector<16x32xf32>
    tpu.vector_store %arg10[%c0_12, %c0_13], %14 {strides = array<i32>} : memref<16x32xf32, #tpu.memory_space<vmem>>, vector<16x32xf32>,
    %c0_i32_14 = arith.constant 0 : i32
    %16 = arith.cmpi eq, %arg1, %c0_i32_14 : i32
    %17 = arith.extui %16 : i1 to i32
    %c0_i32_15 = arith.constant 0 : i32
    %18 = arith.cmpi ne, %17, %c0_i32_15 : i32
    scf.if %18 {
      %c0_16 = arith.constant 0 : index
      %c0_17 = arith.constant 0 : index
      %19 = vector.load %arg10[%c0_16, %c0_17] : memref<16x32xf32, #tpu.memory_space<vmem>>, vector<16x32xf32>
      %cst_18 = arith.constant dense<0.000000e+00> : vector<16xf32>
      %20 = vector.multi_reduction <add>, %19, %cst_18 [1] : vector<16x32xf32> to vector<16xf32>
      %21 = vector.shape_cast %20 : vector<16xf32> to vector<16x1xf32>
      %cst_19 = arith.constant 3.200000e+01 : f32
      %22 = vector.broadcast %cst_19 : f32 to vector<16x1xf32>
      %23 = arith.divf %21, %22 : vector<16x1xf32>
      %24 = vector.broadcast %23 : vector<16x1xf32> to vector<16x32xf32>
      %25 = arith.subf %19, %24 : vector<16x32xf32>
      %26 = arith.mulf %25, %25 : vector<16x32xf32>
      %cst_20 = arith.constant dense<0.000000e+00> : vector<16xf32>
      %27 = vector.multi_reduction <add>, %26, %cst_20 [1] : vector<16x32xf32> to vector<16xf32>
      %28 = vector.shape_cast %27 : vector<16xf32> to vector<16x1xf32>
      %cst_21 = arith.constant 3.200000e+01 : f32
      %29 = vector.broadcast %cst_21 : f32 to vector<16x1xf32>
      %30 = arith.divf %28, %29 : vector<16x1xf32>
      %cst_22 = arith.constant 9.99999974E-6 : f32
      %31 = vector.broadcast %cst_22 : f32 to vector<16x1xf32>
      %32 = arith.addf %30, %31 : vector<16x1xf32>
      %33 = math.rsqrt %32 : vector<16x1xf32>
      %c0_23 = arith.constant 0 : index
      %c0_24 = arith.constant 0 : index
      %34 = vector.load %arg7[%c0_23, %c0_24] : memref<1x32xf32, #tpu.memory_space<vmem>>, vector<1x32xf32>
      %35 = vector.broadcast %33 : vector<16x1xf32> to vector<16x32xf32>
      %36 = vector.broadcast %34 : vector<1x32xf32> to vector<16x32xf32>
      %37 = arith.mulf %35, %36 : vector<16x32xf32>
      %38 = vector.broadcast %23 : vector<16x1xf32> to vector<16x32xf32>
      %39 = arith.subf %19, %38 : vector<16x32xf32>
      %40 = arith.mulf %39, %37 : vector<16x32xf32>
      %c0_25 = arith.constant 0 : index
      %c0_26 = arith.constant 0 : index
      %41 = vector.load %arg8[%c0_25, %c0_26] : memref<1x32xf32, #tpu.memory_space<vmem>>, vector<1x32xf32>
      %42 = vector.broadcast %41 : vector<1x32xf32> to vector<16x32xf32>
      %43 = arith.addf %40, %42 : vector<16x32xf32>
      %c0_27 = arith.constant 0 : index
      %c0_28 = arith.constant 0 : index
      %44 = vector.load %arg9[%c0_27, %c0_28] : memref<16x32xf32, #tpu.memory_space<vmem>>, vector<16x32xf32>
      tpu.vector_store %arg9[%c0_27, %c0_28], %43 {strides = array<i32>} : memref<16x32xf32, #tpu.memory_space<vmem>>, vector<16x32xf32>,
    } else {
    }
    return
  }
  func.func @transform_0(%arg0: i32, %arg1: i32) -> (i32, i32) {
    %c0_i32 = arith.constant 0 : i32
    %c0_i32_0 = arith.constant 0 : i32
    return %arg0, %c0_i32 : i32, i32
  }
  func.func @transform_1(%arg0: i32, %arg1: i32) -> (i32, i32) {
    %c0_i32 = arith.constant 0 : i32
    %c0_i32_0 = arith.constant 0 : i32
    return %c0_i32, %arg1 : i32, i32
  }
  func.func @transform_2(%arg0: i32, %arg1: i32) -> (i32, i32) {
    %c0_i32 = arith.constant 0 : i32
    %c0_i32_0 = arith.constant 0 : i32
    return %c0_i32, %arg1 : i32, i32
  }
  func.func @transform_3(%arg0: i32, %arg1: i32) -> (i32, i32) {
    %c0_i32 = arith.constant 0 : i32
    %c0_i32_0 = arith.constant 0 : i32
    return %arg1, %c0_i32 : i32, i32
  }
  func.func @transform_4(%arg0: i32, %arg1: i32) -> (i32, i32) {
    %c0_i32 = arith.constant 0 : i32
    %c0_i32_0 = arith.constant 0 : i32
    %c0_i32_1 = arith.constant 0 : i32
    return %c0_i32, %c0_i32_0 : i32, i32
  }
  func.func @transform_5(%arg0: i32, %arg1: i32) -> (i32, i32) {
    %c0_i32 = arith.constant 0 : i32
    %c0_i32_0 = arith.constant 0 : i32
    %c0_i32_1 = arith.constant 0 : i32
    return %c0_i32, %c0_i32_0 : i32, i32
  }
  func.func @transform_6(%arg0: i32, %arg1: i32) -> (i32, i32) {
    %c0_i32 = arith.constant 0 : i32
    %c0_i32_0 = arith.constant 0 : i32
    %c0_i32_1 = arith.constant 0 : i32
    return %c0_i32, %c0_i32_0 : i32, i32
  }
  func.func @transform_7(%arg0: i32, %arg1: i32) -> (i32, i32) {
    %c0_i32 = arith.constant 0 : i32
    %c0_i32_0 = arith.constant 0 : i32
    return %arg0, %c0_i32 : i32, i32
  }
}

</mosaic_0001>

<llo_original>
// kernel: tpu_custom_call.1
$region0: #{tpu_custom_call.1}
  #allocation0 [shape = 'u32[]', space=smem, size = 0x4, offset = 0x4, fixed_abs, tag = 'smem constant byte address 0x4 - core index']
  #allocation1 [shape = 'u32[144,128]{1,0:T(1,128)}', space=vmem, size = 0x12000, scoped, tag = 'internal scratch']
  #allocation2 [shape = 'f32[16,32]{1,0:T(8,128)}', space=vmem, size = 0x2000, scoped, tag = 'scratch operand']
  %s0 = inlined_call_operand.hbm [shape: f32[16,32], index: 0, kind: input, shape index: {}]
  %s1 = inlined_call_operand.hbm [shape: f32[32,128], index: 1, kind: input, shape index: {}]
  %s2 = inlined_call_operand.hbm [shape: f32[1,128], index: 2, kind: input, shape index: {}]
  %s3 = inlined_call_operand.hbm [shape: f32[128,32], index: 3, kind: input, shape index: {}]
  %s4 = inlined_call_operand.hbm [shape: f32[1,32], index: 4, kind: input, shape index: {}]
  %s5 = inlined_call_operand.hbm [shape: f32[1,32], index: 5, kind: input, shape index: {}]
  %s6 = inlined_call_operand.hbm [shape: f32[1,32], index: 6, kind: input, shape index: {}]
  %s7 = inlined_call_operand.hbm [shape: f32[16,32], index: 7, kind: output, shape index: {}]
  %s8 = sld [smem:[#allocation0]]
  $region74: #{tpu_custom_call.1} parent=0
    _
  %s10 = ssub.s32 1, %s8
  %s11 = scalar_select 0, %s10, %s8
  $region1: #{tpu_custom_call.1} parent=0
    #allocation3 [shape = 'u8[8192]{0}', space=vmem, size = 0x2000, scoped, tag = 'input window, operand 0, single buffered']
    #allocation4 [shape = 's32[1]{0}', space=sflag, size = 0x4, scoped, tag = 'scoped memory for tpu_custom_call.1']
    #allocation5 [shape = 's32[1]{0}', space=sflag, size = 0x4, scoped, tag = 'scoped memory for tpu_custom_call.1']
    #allocation6 [shape = 'u8[16384]{0}', space=vmem, size = 0x4000, scoped, tag = 'input window, operand 1, single buffered']
    #allocation7 [shape = 's32[1]{0}', space=sflag, size = 0x4, scoped, tag = 'scoped memory for tpu_custom_call.1']
    #allocation8 [shape = 'u8[512]{0}', space=vmem, size = 0x400, scoped, tag = 'input window, operand 2, single buffered']
    #allocation9 [shape = 'u8[65536]{0}', space=vmem, size = 0x10000, scoped, tag = 'input window, operand 3, single buffered']
    #allocation10 [shape = 's32[1]{0}', space=sflag, size = 0x4, scoped, tag = 'scoped memory for tpu_custom_call.1']
    #allocation11 [shape = 'u8[512]{0}', space=vmem, size = 0x400, scoped, tag = 'input window, operand 4, single buffered']
    #allocation12 [shape = 'u8[512]{0}', space=vmem, size = 0x400, scoped, tag = 'input window, operand 5, single buffered']
    #allocation13 [shape = 's32[1]{0}', space=sflag, size = 0x4, scoped, tag = 'scoped memory for tpu_custom_call.1']
    #allocation14 [shape = 'u8[512]{0}', space=vmem, size = 0x400, scoped, tag = 'input window, operand 6, single buffered']
    #allocation15 [shape = 'u8[8192]{0}', space=vmem, size = 0x2000, scoped, tag = 'output window, operand 0, single buffered']
    %12 = vsyncpa [#allocation4], 0
    %13 = vsyncpa [#allocation7], 0
    %14 = vsyncpa [#allocation10], 0
    %15 = vsyncpa [#allocation13], 0
    %16 = vsyncpa [#allocation5], 0
    // Predicated region
    $region2: #{tpu_custom_call.1} parent=1 // pred_check
      _
    $region3: #{tpu_custom_call.1} parent=1 // pred_check_branch
      %18 = sbr.rel (0) target = $region5
    $region4: #{tpu_custom_call.1} parent=1 // pred_region
      %s20 = ssub.s32 256, 256
      %21 = vsyncadd [#allocation4], %s20
      %s22 = sshll.u32 [#allocation3], 4
      %s23 = int_to_ptr.vmem [resolvable:$true] %s22
      %28 = dma.hbm_to_vmem [thread:$0]  %s0, 256, %s23, [#allocation4], 128, 128, 8
    $region5: #{tpu_custom_call.1} parent=1 // pred_fallthru
      _
    // Predicated region
    $region6: #{tpu_custom_call.1} parent=1 // pred_check
      _
    $region7: #{tpu_custom_call.1} parent=1 // pred_check_branch
      %30 = sbr.rel (0) target = $region9
    $region8: #{tpu_custom_call.1} parent=1 // pred_region
      %s32 = ssub.s32 512, 512
      %33 = vsyncadd [#allocation7], %s32
      %s34 = sshll.u32 [#allocation6], 4
      %s35 = int_to_ptr.vmem [resolvable:$true] %s34
      %40 = dma.hbm_to_vmem [thread:$0]  %s1, 512, %s35, [#allocation7], 128, 128, 8
    $region9: #{tpu_custom_call.1} parent=1 // pred_fallthru
      _
    // Predicated region
    $region10: #{tpu_custom_call.1} parent=1 // pred_check
      _
    $region11: #{tpu_custom_call.1} parent=1 // pred_check_branch
      %42 = sbr.rel (0) target = $region13
    $region12: #{tpu_custom_call.1} parent=1 // pred_region
      %s44 = ssub.s32 16, 16
      %45 = vsyncadd [#allocation7], %s44
      %s47 = sshll.u32 [#allocation8], 4
      %s48 = int_to_ptr.vmem [resolvable:$true] %s47
      %50 = dma.hbm_to_vmem [thread:$0]  %s2, 16, %s48, [#allocation7]
    $region13: #{tpu_custom_call.1} parent=1 // pred_fallthru
      _
    // Predicated region
    $region14: #{tpu_custom_call.1} parent=1 // pred_check
      _
    $region15: #{tpu_custom_call.1} parent=1 // pred_check_branch
      %52 = sbr.rel (0) target = $region17
    $region16: #{tpu_custom_call.1} parent=1 // pred_region
      %s54 = ssub.s32 2048, 2048
      %55 = vsyncadd [#allocation10], %s54
      %s56 = sshll.u32 [#allocation9], 4
      %s57 = int_to_ptr.vmem [resolvable:$true] %s56
      %62 = dma.hbm_to_vmem [thread:$0]  %s3, 2048, %s57, [#allocation10], 128, 128, 8
    $region17: #{tpu_custom_call.1} parent=1 // pred_fallthru
      _
    // Predicated region
    $region18: #{tpu_custom_call.1} parent=1 // pred_check
      _
    $region19: #{tpu_custom_call.1} parent=1 // pred_check_branch
      %64 = sbr.rel (0) target = $region21
    $region20: #{tpu_custom_call.1} parent=1 // pred_region
      %s66 = ssub.s32 16, 16
      %67 = vsyncadd [#allocation10], %s66
      %s69 = sshll.u32 [#allocation11], 4
      %s70 = int_to_ptr.vmem [resolvable:$true] %s69
      %72 = dma.hbm_to_vmem [thread:$0]  %s4, 16, %s70, [#allocation10]
    $region21: #{tpu_custom_call.1} parent=1 // pred_fallthru
      _
    // Predicated region
    $region22: #{tpu_custom_call.1} parent=1 // pred_check
      _
    $region23: #{tpu_custom_call.1} parent=1 // pred_check_branch
      %74 = sbr.rel (0) target = $region25
    $region24: #{tpu_custom_call.1} parent=1 // pred_region
      %s76 = ssub.s32 16, 16
      %77 = vsyncadd [#allocation13], %s76
      %s79 = sshll.u32 [#allocation12], 4
      %s80 = int_to_ptr.vmem [resolvable:$true] %s79
      %82 = dma.hbm_to_vmem [thread:$0]  %s5, 16, %s80, [#allocation13]
    $region25: #{tpu_custom_call.1} parent=1 // pred_fallthru
      _
    // Predicated region
    $region26: #{tpu_custom_call.1} parent=1 // pred_check
      _
    $region27: #{tpu_custom_call.1} parent=1 // pred_check_branch
      %84 = sbr.rel (0) target = $region29
    $region28: #{tpu_custom_call.1} parent=1 // pred_region
      %s86 = ssub.s32 16, 16
      %87 = vsyncadd [#allocation13], %s86
      %s89 = sshll.u32 [#allocation14], 4
      %s90 = int_to_ptr.vmem [resolvable:$true] %s89
      %92 = dma.hbm_to_vmem [thread:$0]  %s6, 16, %s90, [#allocation13]
    $region29: #{tpu_custom_call.1} parent=1 // pred_fallthru
      _
    // Predicated region
    $region30: #{tpu_custom_call.1} parent=1 // pred_check
      _
    $region31: #{tpu_custom_call.1} parent=1 // pred_check_branch
      %94 = sbr.rel (0) target = $region33
    $region32: #{tpu_custom_call.1} parent=1 // pred_region
      %95 = dma.done [#allocation4], 256
    $region33: #{tpu_custom_call.1} parent=1 // pred_fallthru
      _
    // Predicated region
    $region34: #{tpu_custom_call.1} parent=1 // pred_check
      _
    $region35: #{tpu_custom_call.1} parent=1 // pred_check_branch
      %97 = sbr.rel (0) target = $region37
    $region36: #{tpu_custom_call.1} parent=1 // pred_region
      %98 = dma.done [#allocation7], 512
    $region37: #{tpu_custom_call.1} parent=1 // pred_fallthru
      _
    // Predicated region
    $region38: #{tpu_custom_call.1} parent=1 // pred_check
      _
    $region39: #{tpu_custom_call.1} parent=1 // pred_check_branch
      %100 = sbr.rel (0) target = $region41
    $region40: #{tpu_custom_call.1} parent=1 // pred_region
      %101 = dma.done [#allocation7], 16
    $region41: #{tpu_custom_call.1} parent=1 // pred_fallthru
      _
    // Predicated region
    $region42: #{tpu_custom_call.1} parent=1 // pred_check
      _
    $region43: #{tpu_custom_call.1} parent=1 // pred_check_branch
      %103 = sbr.rel (0) target = $region45
    $region44: #{tpu_custom_call.1} parent=1 // pred_region
      %104 = dma.done [#allocation10], 2048
    $region45: #{tpu_custom_call.1} parent=1 // pred_fallthru
      _
    // Predicated region
    $region46: #{tpu_custom_call.1} parent=1 // pred_check
      _
    $region47: #{tpu_custom_call.1} parent=1 // pred_check_branch
      %106 = sbr.rel (0) target = $region49
    $region48: #{tpu_custom_call.1} parent=1 // pred_region
      %107 = dma.done [#allocation10], 16
    $region49: #{tpu_custom_call.1} parent=1 // pred_fallthru
      _
    // Predicated region
    $region50: #{tpu_custom_call.1} parent=1 // pred_check
      _
    $region51: #{tpu_custom_call.1} parent=1 // pred_check_branch
      %109 = sbr.rel (0) target = $region53
    $region52: #{tpu_custom_call.1} parent=1 // pred_region
      %110 = dma.done [#allocation13], 16
    $region53: #{tpu_custom_call.1} parent=1 // pred_fallthru
      _
    // Predicated region
    $region54: #{tpu_custom_call.1} parent=1 // pred_check
      _
    $region55: #{tpu_custom_call.1} parent=1 // pred_check_branch
      %112 = sbr.rel (0) target = $region57
    $region56: #{tpu_custom_call.1} parent=1 // pred_region
      %113 = dma.done [#allocation13], 16
    $region57: #{tpu_custom_call.1} parent=1 // pred_fallthru
      _
    %v114 = vld [vmem:[#allocation3] sm:$0xff]
    %v115 = vld [vmem:[#allocation3 + $0x8] sm:$0xff]
    %p116 = scmp.eq.s32.totalorder 0, 0
    // Predicated region
    $region58: #{tpu_custom_call.1} parent=1 // pred_check
      %p117 = pneg %p116
    $region59: #{tpu_custom_call.1} parent=1 // pred_check_branch
      %119 = sbr.rel (%p117) target = $region61
    $region60: #{tpu_custom_call.1} parent=1 // pred_region
      %v120 = vld [vmem:[#allocation11] sm:$0x1]
      %v122 = vlaneseq
      %v123 = vshrl.u32 %v122, 7
      %v124 = vsub.s32 0, %v123
      %v125 = vrot.slane %v120, %v124
      %v127 = vadd.f32 %v125, %v114
      %v128 = vadd.f32 %v125, %v115
      %vm129 = vcmask 261120
      %130 = vst.msk [vmem:[#allocation2] sm:$0xff] %vm129, %v127
      %131 = vst.msk [vmem:[#allocation2 + $0x8] sm:$0xff] %vm129, %v128
    $region61: #{tpu_custom_call.1} parent=1 // pred_fallthru
      _
    %v132 = vld [vmem:[#allocation6] sm:$0xff]
    %v133 = vld [vmem:[#allocation6 + $0x8] sm:$0xff]
    %v134 = vld [vmem:[#allocation6 + $0x10] sm:$0xff]
    %v135 = vld [vmem:[#allocation6 + $0x18] sm:$0xff]
    %v136 = vld [vmem:[#allocation9] sm:$0xff]
    %v137 = vld [vmem:[#allocation9 + $0x8] sm:$0xff]
    %v138 = vld [vmem:[#allocation9 + $0x10] sm:$0xff]
    %v139 = vld [vmem:[#allocation9 + $0x18] sm:$0xff]
    %v140 = vld [vmem:[#allocation9 + $0x20] sm:$0xff]
    %v141 = vld [vmem:[#allocation9 + $0x28] sm:$0xff]
    %v142 = vld [vmem:[#allocation9 + $0x30] sm:$0xff]
    %v143 = vld [vmem:[#allocation9 + $0x38] sm:$0xff]
    %v144 = vld [vmem:[#allocation9 + $0x40] sm:$0xff]
    %v145 = vld [vmem:[#allocation9 + $0x48] sm:$0xff]
    %v146 = vld [vmem:[#allocation9 + $0x50] sm:$0xff]
    %v147 = vld [vmem:[#allocation9 + $0x58] sm:$0xff]
    %v148 = vld [vmem:[#allocation9 + $0x60] sm:$0xff]
    %v149 = vld [vmem:[#allocation9 + $0x68] sm:$0xff]
    %v150 = vld [vmem:[#allocation9 + $0x70] sm:$0xff]
    %v151 = vld [vmem:[#allocation9 + $0x78] sm:$0xff]
    %v152 = vld [vmem:[#allocation8] sm:$0x1]
    %v154 = vlaneseq
    %v155 = vshrl.u32 %v154, 7
    %v156 = vsub.s32 0, %v155
    %v157 = vrot.slane %v152, %v156
    %vm159 = vcmask 261120
    %v161 = vsel %vm159, %v114, 0
    %v164 = vsel %vm159, %v115, 0
    %166 = vmatprep.subr.mxu0 0.0
    %167 = vmatpush1.msra.mxu0 %v132
    %168 = vmatprep.subr.mxu0 0.0
    %169 = vmatpush1.msra.mxu0 %v133
    %170 = vmatprep.subr.mxu0 0.0
    %171 = vmatpush1.msra.mxu0 %v134
    %172 = vmatprep.subr.mxu0 0.0
    %173 = vmatpush1.msra.mxu0 %v135
    %174 = vmatprep.subr.mxu0 0.0
    %175 = vmatpush1.msra.mxu0 0.0
    %176 = vmatprep.subr.mxu0 0.0
    %177 = vmatpush1.msra.mxu0 0.0
    %178 = vmatprep.subr.mxu0 0.0
    %179 = vmatpush1.msra.mxu0 0.0
    %180 = vmatprep.subr.mxu0 0.0
    %181 = vmatpush1.msra.mxu0 0.0
    %182 = vmatprep.subr.mxu0 0.0
    %183 = vmatpush1.msra.mxu0 0.0
    %184 = vmatprep.subr.mxu0 0.0
    %185 = vmatpush1.msra.mxu0 0.0
    %186 = vmatprep.subr.mxu0 0.0
    %187 = vmatpush1.msra.mxu0 0.0
    %188 = vmatprep.subr.mxu0 0.0
    %189 = vmatpush1.msra.mxu0 0.0
    %190 = vmatprep.subr.mxu0 0.0
    %191 = vmatpush1.msra.mxu0 0.0
    %192 = vmatprep.subr.mxu0 0.0
    %193 = vmatpush1.msra.mxu0 0.0
    %194 = vmatprep.subr.mxu0 0.0
    %195 = vmatpush1.msra.mxu0 0.0
    %196 = vmatprep.subr.mxu0 0.0
    %197 = vmatpush1.msra.mxu0 0.0
    %198 = vmatprep.subr.mxu0 0.0
    %199 = vmatpush1.msra.mxu0 0.0
    %200 = vmatprep.subr.mxu0 0.0
    %201 = vmatpush1.msra.mxu0 0.0
    %202 = vmatprep.subr.mxu0 0.0
    %203 = vmatpush1.msra.mxu0 0.0
    %204 = vmatprep.subr.mxu0 0.0
    %205 = vmatpush1.msra.mxu0 0.0
    %206 = vmatprep.subr.mxu0 0.0
    %207 = vmatpush1.msra.mxu0 0.0
    %208 = vmatprep.subr.mxu0 0.0
    %209 = vmatpush1.msra.mxu0 0.0
    %210 = vmatprep.subr.mxu0 0.0
    %211 = vmatpush1.msra.mxu0 0.0
    %212 = vmatprep.subr.mxu0 0.0
    %213 = vmatpush1.msra.mxu0 0.0
    %214 = vmatprep.subr.mxu0 0.0
    %215 = vmatpush1.msra.mxu0 0.0
    %216 = vmatprep.subr.mxu0 0.0
    %217 = vmatpush1.msra.mxu0 0.0
    %218 = vmatprep.subr.mxu0 0.0
    %219 = vmatpush1.msra.mxu0 0.0
    %220 = vmatprep.subr.mxu0 0.0
    %221 = vmatpush1.msra.mxu0 0.0
    %222 = vmatprep.subr.mxu0 0.0
    %223 = vmatpush1.msra.mxu0 0.0
    %224 = vmatprep.subr.mxu0 0.0
    %225 = vmatpush1.msra.mxu0 0.0
    %226 = vmatprep.subr.mxu0 0.0
    %227 = vmatpush1.msra.mxu0 0.0
    %228 = vmatprep.subr.mxu0 0.0
    %229 = vmatpush1.msra.mxu0 0.0
    %230 = vmatprep.mubr.f32.mxu0 0.0
    %231 = vmatmul.mubr.f32.gmra.mrb[0].mxu0 %v161
    %v232 = vpop.f32.mrb[0].mxu0
    %v233 = vadd.f32 %v157, %v232
    %v234 = vpop.f32.mrb[0].mxu0
    %235 = vmatprep.mubr.f32.mxu0 0.0
    %236 = vmatmul.mubr.f32.gmra.mrb[0].mxu0 %v164
    %v237 = vpop.f32.mrb[0].mxu0
    %v238 = vadd.f32 %v157, %v237
    %v239 = vpop.f32.mrb[0].mxu0
    %240 = vdwg.mxu0
    %v241 = vmax.f32 %v233, 0.0
    %v242 = vmax.f32 %v238, 0.0
    %v243 = vld [vmem:[#allocation2] sm:$0xff]
    %v244 = vld [vmem:[#allocation2 + $0x8] sm:$0xff]
    %245 = vmatprep.subr.mxu0 0.0
    %246 = vmatpush1.msra.mxu0 %v136
    %247 = vmatprep.subr.mxu0 0.0
    %248 = vmatpush1.msra.mxu0 %v137
    %249 = vmatprep.subr.mxu0 0.0
    %250 = vmatpush1.msra.mxu0 %v138
    %251 = vmatprep.subr.mxu0 0.0
    %252 = vmatpush1.msra.mxu0 %v139
    %253 = vmatprep.subr.mxu0 0.0
    %254 = vmatpush1.msra.mxu0 %v140
    %255 = vmatprep.subr.mxu0 0.0
    %256 = vmatpush1.msra.mxu0 %v141
    %257 = vmatprep.subr.mxu0 0.0
    %258 = vmatpush1.msra.mxu0 %v142
    %259 = vmatprep.subr.mxu0 0.0
    %260 = vmatpush1.msra.mxu0 %v143
    %261 = vmatprep.subr.mxu0 0.0
    %262 = vmatpush1.msra.mxu0 %v144
    %263 = vmatprep.subr.mxu0 0.0
    %264 = vmatpush1.msra.mxu0 %v145
    %265 = vmatprep.subr.mxu0 0.0
    %266 = vmatpush1.msra.mxu0 %v146
    %267 = vmatprep.subr.mxu0 0.0
    %268 = vmatpush1.msra.mxu0 %v147
    %269 = vmatprep.subr.mxu0 0.0
    %270 = vmatpush1.msra.mxu0 %v148
    %271 = vmatprep.subr.mxu0 0.0
    %272 = vmatpush1.msra.mxu0 %v149
    %273 = vmatprep.subr.mxu0 0.0
    %274 = vmatpush1.msra.mxu0 %v150
    %275 = vmatprep.subr.mxu0 0.0
    %276 = vmatpush1.msra.mxu0 %v151
    %277 = vmatprep.subr.mxu0 0.0
    %278 = vmatpush1.msra.mxu0 0.0
    %279 = vmatprep.subr.mxu0 0.0
    %280 = vmatpush1.msra.mxu0 0.0
    %281 = vmatprep.subr.mxu0 0.0
    %282 = vmatpush1.msra.mxu0 0.0
    %283 = vmatprep.subr.mxu0 0.0
    %284 = vmatpush1.msra.mxu0 0.0
    %285 = vmatprep.subr.mxu0 0.0
    %286 = vmatpush1.msra.mxu0 0.0
    %287 = vmatprep.subr.mxu0 0.0
    %288 = vmatpush1.msra.mxu0 0.0
    %289 = vmatprep.subr.mxu0 0.0
    %290 = vmatpush1.msra.mxu0 0.0
    %291 = vmatprep.subr.mxu0 0.0
    %292 = vmatpush1.msra.mxu0 0.0
    %293 = vmatprep.subr.mxu0 0.0
    %294 = vmatpush1.msra.mxu0 0.0
    %295 = vmatprep.subr.mxu0 0.0
    %296 = vmatpush1.msra.mxu0 0.0
    %297 = vmatprep.subr.mxu0 0.0
    %298 = vmatpush1.msra.mxu0 0.0
    %299 = vmatprep.subr.mxu0 0.0
    %300 = vmatpush1.msra.mxu0 0.0
    %301 = vmatprep.subr.mxu0 0.0
    %302 = vmatpush1.msra.mxu0 0.0
    %303 = vmatprep.subr.mxu0 0.0
    %304 = vmatpush1.msra.mxu0 0.0
    %305 = vmatprep.subr.mxu0 0.0
    %306 = vmatpush1.msra.mxu0 0.0
    %307 = vmatprep.subr.mxu0 0.0
    %308 = vmatpush1.msra.mxu0 0.0
    %309 = vmatprep.mubr.f32.mxu0 0.0
    %310 = vmatmul.mubr.f32.gmra.mrb[0].mxu0 %v241
    %v311 = vpop.f32.mrb[0].mxu0
    %v312 = vadd.f32 0.0, %v311
    %v313 = vpop.f32.mrb[0].mxu0
    %314 = vmatprep.mubr.f32.mxu0 0.0
    %315 = vmatmul.mubr.f32.gmra.mrb[0].mxu0 %v242
    %v316 = vpop.f32.mrb[0].mxu0
    %v317 = vadd.f32 0.0, %v316
    %v318 = vpop.f32.mrb[0].mxu0
    %319 = vdwg.mxu0
    %v320 = vadd.f32 %v243, %v312
    %v321 = vadd.f32 %v244, %v317
    %322 = vst.msk [vmem:[#allocation2] sm:$0xff] %vm159, %v320
    %323 = vst.msk [vmem:[#allocation2 + $0x8] sm:$0xff] %vm159, %v321
    // Predicated region
    $region62: #{tpu_custom_call.1} parent=1 // pred_check
      %p324 = pneg %p116
    $region63: #{tpu_custom_call.1} parent=1 // pred_check_branch
      %326 = sbr.rel (%p324) target = $region65
    $region64: #{tpu_custom_call.1} parent=1 // pred_region
      %v327 = vld [vmem:[#allocation2] sm:$0xff]
      %v328 = vld [vmem:[#allocation2 + $0x8] sm:$0xff]
      %v329 = vsel %vm159, %v327, 0.0
      %330 = vadd.xlane.f32.xlu0 %v329
      %v331 = vpop.xlane.xlu0 %330
      %v332 = vsel %vm159, %v328, 0.0
      %333 = vadd.xlane.f32.xlu0 %v332
      %v334 = vpop.xlane.xlu0 %333
      %v335 = vrcp.pop 32.0
      %v336 = vmul.f32 %v331, %v335
      %v337 = vmul.f32 %v334, %v335
      %v338 = vsub.f32 %v327, %v336
      %v339 = vsub.f32 %v328, %v337
      %v340 = vmul.f32 %v338, %v338
      %v341 = vmul.f32 %v339, %v339
      %v342 = vsel %vm159, %v340, 0.0
      %343 = vadd.xlane.f32.xlu0 %v342
      %v344 = vpop.xlane.xlu0 %343
      %v345 = vsel %vm159, %v341, 0.0
      %346 = vadd.xlane.f32.xlu0 %v345
      %v347 = vpop.xlane.xlu0 %346
      %v348 = vmul.f32 %v344, %v335
      %v349 = vmul.f32 %v347, %v335
      %v350 = vadd.f32 %v348, 1e-05
      %v351 = vadd.f32 %v349, 1e-05
      %v352 = vrsqrt.pop %v350
      %v353 = vrsqrt.pop %v351
      %v354 = vld [vmem:[#allocation12] sm:$0x1]
      %v356 = vlaneseq
      %v357 = vshrl.u32 %v356, 7
      %v358 = vsub.s32 0, %v357
      %v359 = vrot.slane %v354, %v358
      %v361 = vmul.f32 %v352, %v359
      %v362 = vmul.f32 %v353, %v359
      %v363 = vmul.f32 %v338, %v361
      %v364 = vmul.f32 %v339, %v362
      %v365 = vld [vmem:[#allocation14] sm:$0x1]
      %v367 = vlaneseq
      %v368 = vshrl.u32 %v367, 7
      %v369 = vsub.s32 0, %v368
      %v370 = vrot.slane %v365, %v369
      %v372 = vadd.f32 %v363, %v370
      %v373 = vadd.f32 %v364, %v370
      %374 = vst.msk [vmem:[#allocation15] sm:$0xff] %vm159, %v372
      %375 = vst.msk [vmem:[#allocation15 + $0x8] sm:$0xff] %vm159, %v373
    $region65: #{tpu_custom_call.1} parent=1 // pred_fallthru
      _
    // Predicated region
    $region66: #{tpu_custom_call.1} parent=1 // pred_check
      _
    $region67: #{tpu_custom_call.1} parent=1 // pred_check_branch
      %377 = sbr.rel (0) target = $region69
    $region68: #{tpu_custom_call.1} parent=1 // pred_region
      %s379 = ssub.s32 256, 256
      %380 = vsyncadd [#allocation5], %s379
      %s381 = sshll.u32 [#allocation15], 4
      %s382 = int_to_ptr.vmem [resolvable:$true] %s381
      %387 = dma.vmem_to_hbm [thread:$0]  %s382, 256, %s7, [#allocation5], 128, 128, 8
    $region69: #{tpu_custom_call.1} parent=1 // pred_fallthru
      _
    // Predicated region
    $region70: #{tpu_custom_call.1} parent=1 // pred_check
      _
    $region71: #{tpu_custom_call.1} parent=1 // pred_check_branch
      %389 = sbr.rel (0) target = $region73
    $region72: #{tpu_custom_call.1} parent=1 // pred_region
      %390 = dma.done [#allocation5], 256
    $region73: #{tpu_custom_call.1} parent=1 // pred_fallthru
      _
    %391 = vsyncpa [#allocation4], 1
    %392 = vsyncpa [#allocation7], 1
    %393 = vsyncpa [#allocation10], 1
    %394 = vsyncpa [#allocation13], 1
    %395 = vsyncpa [#allocation5], 1

</llo_original>
